<compile_context>
chip_gen: v7x
topology: tpu7x:2x2x1
jax: 0.10.0
libtpu: 0.0.40
codegen_flags: <defaults>
</compile_context>

<pallas_src>
import functools

import numpy as np
import jax
import jax.numpy as jnp
from jax import lax
from jax.experimental import pallas as pl
from jax.experimental.pallas import tpu as pltpu


_NUM_JOINTS = 18
# TODO(synk): get_edge() reads utils/18_adj.txt; the file is unavailable here, so a
# standard 18-keypoint (OpenPose/COCO) skeleton is embedded as the adjacency list.
_EDGE_LIST_18 = [
    (1, 2), (2, 3), (3, 4), (4, 5), (2, 6), (6, 7), (7, 8),
    (2, 9), (9, 10), (10, 11), (2, 12), (12, 13), (13, 14),
    (1, 15), (15, 17), (1, 16), (16, 18),
]   # 1-indexed pairs, as they would appear in 18_adj.txt


def get_edge(num_class=_NUM_JOINTS, relation_list=_EDGE_LIST_18):
    """Mirror of utils.get_edge(): symmetric 0/1 adjacency from 1-indexed pairs."""
    m = np.zeros((num_class, num_class), dtype=np.float32)
    for x, y in relation_list:
        m[x - 1, y - 1] = 1.0
        m[y - 1, x - 1] = 1.0
    return m


# ------------------------------ Pallas kernel ------------------------------
def _edge_ohkm_kernel(pred_ref, tgt_ref, w4_ref, seg_ref, cpk_ref, out_ref, *,
                      num_joints, topk):
    """One block of B samples per grid step.

    pred_ref, tgt_ref : (B*J, HW) heatmap rows (native dtype), row = b*J + j.
    w4_ref            : (HW, 4)   resident constant [1 | x-cx | y-cy | 0].
    seg_ref           : (B, B*J)  resident segment-sum matrix  Seg[b, r] = [r//J == b].
    cpk_ref           : (B*J, 3J) resident [Mdeg + M@E | M | M@E],
                        M[r, j] = [r%J == j], E = adjacency, deg = row sums of E.
    out_ref           : (1, B, 1) per-sample OHKM loss (already divided by topk).
    """
    J = num_joints
    w4 = w4_ref[...]                                            # (HW, 4)

    def integral_coords(hm_ref):
        hm = hm_ref[...].astype(jnp.float32)                    # (B*J, HW)
        m = jnp.max(hm, axis=1, keepdims=True)                  # (R, 1)
        e = jnp.exp(hm - m)                                     # (R, HW)  (EUP)
        # MXU: [sum(e), sum(e*x), sum(e*y), 0] in one matmul.
        sums = jnp.dot(e, w4, preferred_element_type=jnp.float32)   # (R, 4)
        inv_z = pl.reciprocal(sums[:, 0:1], approx=False)       # tiny column; exact
        # Centered coordinates; the constant center offset cancels in the
        # edge differences below, so it never needs to be added back.
        return sums[:, 1:2] * inv_z, sums[:, 2:3] * inv_z       # (R, 1) each

    px, py = integral_coords(pred_ref)
    gx, gy = integral_coords(tgt_ref)
    dx = px - gx                                                # (R, 1)
    dy = py - gy
    s = dx * dx + dy * dy                                       # (R, 1)

    # L[b, i] = 0.5*(deg_i*s_{b,i} + (E s_b)_i) - dx_{b,i}(E dx_b)_i - dy_{b,i}(E dy_b)_i
    # Every (B, J)-shaped term is of the form Seg @ (x * C) with a constant C,
    # so one matmul produces them all (and performs the (B*J,1)->(B,J) re-layout).
    cpk = cpk_ref[...]                                          # (R, 3J)
    ca = cpk[:, 0:J]                                            # Mdeg + M@E
    m2 = cpk[:, J:3 * J]                                        # [M | M@E]
    rhs = jnp.concatenate([s * ca, dx * m2, dy * m2], axis=1)   # (R, 5J)
    mats = jnp.dot(seg_ref[...], rhs,
                   preferred_element_type=jnp.float32)          # (B, 5J)

    a_term = mats[:, 0:J]          # deg*s + E@s        per (b, joint)
    dx_m = mats[:, J:2 * J]        # dx
    edx_m = mats[:, 2 * J:3 * J]   # E@dx
    dy_m = mats[:, 3 * J:4 * J]    # dy
    edy_m = mats[:, 4 * J:5 * J]   # E@dy
    per_joint = 0.5 * a_term - (dx_m * edx_m + dy_m * edy_m)    # (B, J)

    # OHKM for all B samples at once: sum(top-k) == total - sum of (J-k) smallest.
    total = jnp.sum(per_joint, axis=1, keepdims=True)           # (B, 1)
    idx = lax.broadcasted_iota(jnp.int32, per_joint.shape, 1)   # (B, J)
    work = per_joint
    dropped = jnp.zeros_like(total)
    for _ in range(max(num_joints - topk, 0)):                  # static unroll (3)
        mval = jnp.min(work, axis=1, keepdims=True)             # (B, 1)
        cand = jnp.where(work == mval, idx, num_joints)         # (B, J) int32
        first = jnp.min(cand, axis=1, keepdims=True)            # (B, 1)
        dropped = dropped + mval
        work = jnp.where(idx == first, float("inf"), work)      # drop one per sample

    out_ref[0] = (total - dropped) * (1.0 / float(topk))        # (B, 1)


# ------------------------------ host wrapper -------------------------------
def _choose_batch_block(n, bytes_per_sample):
    """Samples per grid step B and (possibly padded) batch size.

    Constraints: B divides the (padded) batch, and the block sublane dim B*18
    must be a multiple of 8 (B % 4 == 0) unless the block covers the whole
    batch (B == N).  Budget: 2 inputs x 2 pipeline buffers x B samples <= ~6 MiB
    so the default scoped-VMEM limit is safe on v5e/v6e/v7x.  Prefer >= 2 grid
    steps so v7x's two TensorCores both get work.
    """
    budget = 6 * 1024 * 1024
    bmax = max(1, min(32, budget // max(1, 4 * bytes_per_sample)))
    best = best_multi = None
    for b in range(1, min(n, bmax) + 1):
        if n % b:
            continue
        if b % 4 != 0 and b != n:
            continue
        best = b
        if n // b >= 2:
            best_multi = b
    if best_multi is not None:
        return best_multi, n
    if best is not None:
        return best, n
    # Rare fallback: no suitable divisor fits the budget -> pad the batch.
    b = min(32, max(4, (bmax // 4) * 4))
    return b, ((n + b - 1) // b) * b


@functools.partial(jax.jit, static_argnames=("topk",))
def edge_ohkm_mse_loss(output, target, edge, topk=15):
    """Forward pass of EdgeOHKMMSELoss (type='MSE')."""
    n, j, h, w = output.shape
    hw = h * w
    assert edge.shape == (j, j), "adjacency must be (num_joints, num_joints)"

    b_blk, n_pad = _choose_batch_block(n, j * hw * output.dtype.itemsize)
    r = b_blk * j
    num_blocks = n_pad // b_blk

    pred, tgt = output, target
    if n_pad != n:
        # Rare path only: zero-pad the batch; padded samples are sliced off below.
        pad = ((0, n_pad - n), (0, 0), (0, 0), (0, 0))
        pred = jnp.pad(pred, pad)
        tgt = jnp.pad(tgt, pad)
    # Trailing-dim collapse of a contiguous NCHW array is free (no HBM copy);
    # heatmaps keep their native dtype through the DMA (cast to f32 in-kernel).
    pred2d = pred.reshape(n_pad * j, hw)
    tgt2d = tgt.reshape(n_pad * j, hw)

    # --- small resident constants (trace-time numpy / tiny XLA ops) ---------
    col = np.arange(hw)
    w4 = np.zeros((hw, 4), np.float32)
    w4[:, 0] = 1.0
    w4[:, 1] = (col % w).astype(np.float32) - (w - 1) / 2.0     # centered x
    w4[:, 2] = (col // w).astype(np.float32) - (h - 1) / 2.0    # centered y
    seg = np.kron(np.eye(b_blk, dtype=np.float32),
                  np.ones((1, j), np.float32))                  # (B, R)
    m_rep = np.kron(np.ones((b_blk, 1), np.float32),
                    np.eye(j, dtype=np.float32))                # (R, J)

    edge_f = edge.astype(jnp.float32)
    deg = jnp.sum(edge_f, axis=1)                               # (J,)
    me = jnp.asarray(m_rep) @ edge_f                            # (R, J) == E[r%J, :]
    cpk = jnp.concatenate(
        [jnp.asarray(m_rep) * deg[None, :] + me,                # Mdeg + M@E
         jnp.asarray(m_rep), me], axis=1)                       # (R, 3J)

    kernel = functools.partial(_edge_ohkm_kernel, num_joints=j, topk=int(topk))
    per_block = pl.pallas_call(
        kernel,
        out_shape=jax.ShapeDtypeStruct((num_blocks, b_blk, 1), jnp.float32),
        grid=(num_blocks,),
        in_specs=[
            pl.BlockSpec((r, hw), lambda i: (i, 0)),            # pred heatmaps
            pl.BlockSpec((r, hw), lambda i: (i, 0)),            # target heatmaps
            pl.BlockSpec((hw, 4), lambda i: (0, 0)),            # resident coord weights
            pl.BlockSpec((b_blk, r), lambda i: (0, 0)),         # resident Seg
            pl.BlockSpec((r, 3 * j), lambda i: (0, 0)),         # resident masks
        ],
        out_specs=pl.BlockSpec((1, b_blk, 1), lambda i: (i, 0, 0)),
        compiler_params=pltpu.CompilerParams(
            dimension_semantics=("parallel",)),
    )(pred2d, tgt2d, jnp.asarray(w4), jnp.asarray(seg), cpk)

    # Each sample is already divided by topk; average over the real batch here.
    per_sample = per_block.reshape(n_pad)[:n]
    return jnp.sum(per_sample) / n


# --------------------------- pure-JAX reference ----------------------------
def _softmax_integral_heatmap(hm):
    # TODO(synk): softmax_integral_heatmap is not defined in the provided spec;
    # this is the standard 2D integral-pose soft-argmax with normal=False.
    n, j, h, w = hm.shape
    p = jax.nn.softmax(hm.reshape(n, j, h * w).astype(jnp.float32), axis=-1)
    p = p.reshape(n, j, h, w)
    accu_x = p.sum(axis=2)                                      # (N, J, W)
    accu_y = p.sum(axis=3)                                      # (N, J, H)
    x = (accu_x * jnp.arange(w, dtype=jnp.float32)).sum(axis=2, keepdims=True)
    y = (accu_y * jnp.arange(h, dtype=jnp.float32)).sum(axis=2, keepdims=True)
    return jnp.concatenate([x, y], axis=2)                      # (N, J, 2)


def _reference(output, target, edge_matrix, topk):
    pred = _softmax_integral_heatmap(output)
    gt = _softmax_integral_heatmap(target)
    n, j = output.shape[0], output.shape[1]
    per_joint = []
    for i in range(j):
        li = jnp.zeros((n, 2), jnp.float32)
        for jj in range(j):
            if edge_matrix[i][jj] == 1:
                pv = pred[:, i] - pred[:, jj]
                gv = gt[:, i] - gt[:, jj]
                li = li + (pv - gv) ** 2                        # MSELoss(reduction='none')
        per_joint.append(li.mean(axis=1, keepdims=True))
    loss = jnp.concatenate(per_joint, axis=1)                   # (N, J)
    topv, _ = jax.lax.top_k(loss, topk)
    return (topv.sum(axis=1) / topk).sum() / n


if __name__ == "__main__":
    key = jax.random.PRNGKey(0)
    k1, k2, k3, k4 = jax.random.split(key, 4)

    edge_np = get_edge()
    edge = jnp.asarray(edge_np)
    TOPK = 15
    J, H, W = _NUM_JOINTS, 16, 16

    # Config 1: tiny batch -> single grid step (B == N path).
    N1 = 2
    out1 = jax.random.normal(k1, (N1, J, H, W), dtype=jnp.float32)
    tgt1 = jax.random.normal(k2, (N1, J, H, W), dtype=jnp.float32)
    loss1 = jax.block_until_ready(edge_ohkm_mse_loss(out1, tgt1, edge, topk=TOPK))
    ref1 = jax.block_until_ready(_reference(out1, tgt1, edge_np, TOPK))
    assert jnp.allclose(loss1, ref1, rtol=5e-3, atol=1e-3), (loss1, ref1)

    # Config 2: batched path (B = 4 samples per step, 2 grid steps).
    N2 = 8
    out2 = jax.random.normal(k3, (N2, J, H, W), dtype=jnp.float32)
    tgt2 = jax.random.normal(k4, (N2, J, H, W), dtype=jnp.float32)
    loss2 = jax.block_until_ready(edge_ohkm_mse_loss(out2, tgt2, edge, topk=TOPK))
    ref2 = jax.block_until_ready(_reference(out2, tgt2, edge_np, TOPK))
    assert jnp.allclose(loss2, ref2, rtol=5e-3, atol=1e-3), (loss2, ref2)

    print("KERNEL_OK")
</pallas_src>

<mosaic_0001>
module attributes {stable_mosaic.version = 11 : i64} {
  func.func @_edge_ohkm_kernel(%arg0: i32, %arg1: memref<36x256xf32, #tpu.memory_space<vmem>>, %arg2: memref<36x256xf32, #tpu.memory_space<vmem>>, %arg3: memref<256x4xf32, #tpu.memory_space<vmem>>, %arg4: memref<2x36xf32, #tpu.memory_space<vmem>>, %arg5: memref<36x54xf32, #tpu.memory_space<vmem>>, %arg6: memref<1x2x1xf32, #tpu.memory_space<vmem>>) attributes {dimension_semantics = [#tpu.dimension_semantics<parallel>], iteration_bounds = array<i64: 1>, scalar_prefetch = 0 : i64, scratch_operands = 0 : i64, tpu.core_type = #tpu.core_type<tc>, window_params = [{transform_indices = @transform_0, window_bounds = array<i64: 36, 256>}, {transform_indices = @transform_1, window_bounds = array<i64: 36, 256>}, {pipeline_mode = #tpu.pipeline_mode<synchronous>, transform_indices = @transform_2, window_bounds = array<i64: 256, 4>}, {pipeline_mode = #tpu.pipeline_mode<synchronous>, transform_indices = @transform_3, window_bounds = array<i64: 2, 36>}, {pipeline_mode = #tpu.pipeline_mode<synchronous>, transform_indices = @transform_4, window_bounds = array<i64: 36, 54>}, {transform_indices = @transform_5, window_bounds = array<i64: 1, 2, 1>}]} {
    %c0 = arith.constant 0 : index
    %c0_0 = arith.constant 0 : index
    %0 = vector.load %arg3[%c0, %c0_0] : memref<256x4xf32, #tpu.memory_space<vmem>>, vector<256x4xf32>
    %c0_1 = arith.constant 0 : index
    %c0_2 = arith.constant 0 : index
    %1 = vector.load %arg1[%c0_1, %c0_2] : memref<36x256xf32, #tpu.memory_space<vmem>>, vector<36x256xf32>
    %cst = arith.constant dense<0xFF800000> : vector<36xf32>
    %2 = vector.multi_reduction <maximumf>, %1, %cst [1] : vector<36x256xf32> to vector<36xf32>
    %3 = vector.shape_cast %2 : vector<36xf32> to vector<36x1xf32>
    %4 = vector.broadcast %3 : vector<36x1xf32> to vector<36x256xf32>
    %5 = arith.subf %1, %4 : vector<36x256xf32>
    %6 = math.exp %5 : vector<36x256xf32>
    %cst_3 = arith.constant dense<0.000000e+00> : vector<36x4xf32>
    %7 = tpu.matmul %6, %0, %cst_3 {dimension_numbers = #tpu.dot_dimension_numbers<[1], [0], [0], [1], [0, 0, 1, 1], [], []>} : vector<36x256xf32>, vector<256x4xf32>, vector<36x4xf32> -> vector<36x4xf32>
    %8 = vector.extract_strided_slice %7 {offsets = [0, 0], sizes = [36, 1], strides = [1, 1]} : vector<36x4xf32> to vector<36x1xf32>
    %9 = tpu.reciprocal %8 : vector<36x1xf32> -> vector<36x1xf32>
    %10 = vector.extract_strided_slice %7 {offsets = [0, 1], sizes = [36, 1], strides = [1, 1]} : vector<36x4xf32> to vector<36x1xf32>
    %11 = arith.mulf %10, %9 : vector<36x1xf32>
    %12 = vector.extract_strided_slice %7 {offsets = [0, 2], sizes = [36, 1], strides = [1, 1]} : vector<36x4xf32> to vector<36x1xf32>
    %13 = arith.mulf %12, %9 : vector<36x1xf32>
    %c0_4 = arith.constant 0 : index
    %c0_5 = arith.constant 0 : index
    %14 = vector.load %arg2[%c0_4, %c0_5] : memref<36x256xf32, #tpu.memory_space<vmem>>, vector<36x256xf32>
    %cst_6 = arith.constant dense<0xFF800000> : vector<36xf32>
    %15 = vector.multi_reduction <maximumf>, %14, %cst_6 [1] : vector<36x256xf32> to vector<36xf32>
    %16 = vector.shape_cast %15 : vector<36xf32> to vector<36x1xf32>
    %17 = vector.broadcast %16 : vector<36x1xf32> to vector<36x256xf32>
    %18 = arith.subf %14, %17 : vector<36x256xf32>
    %19 = math.exp %18 : vector<36x256xf32>
    %cst_7 = arith.constant dense<0.000000e+00> : vector<36x4xf32>
    %20 = tpu.matmul %19, %0, %cst_7 {dimension_numbers = #tpu.dot_dimension_numbers<[1], [0], [0], [1], [0, 0, 1, 1], [], []>} : vector<36x256xf32>, vector<256x4xf32>, vector<36x4xf32> -> vector<36x4xf32>
    %21 = vector.extract_strided_slice %20 {offsets = [0, 0], sizes = [36, 1], strides = [1, 1]} : vector<36x4xf32> to vector<36x1xf32>
    %22 = tpu.reciprocal %21 : vector<36x1xf32> -> vector<36x1xf32>
    %23 = vector.extract_strided_slice %20 {offsets = [0, 1], sizes = [36, 1], strides = [1, 1]} : vector<36x4xf32> to vector<36x1xf32>
    %24 = arith.mulf %23, %22 : vector<36x1xf32>
    %25 = vector.extract_strided_slice %20 {offsets = [0, 2], sizes = [36, 1], strides = [1, 1]} : vector<36x4xf32> to vector<36x1xf32>
    %26 = arith.mulf %25, %22 : vector<36x1xf32>
    %27 = arith.subf %11, %24 : vector<36x1xf32>
    %28 = arith.subf %13, %26 : vector<36x1xf32>
    %29 = arith.mulf %27, %27 : vector<36x1xf32>
    %30 = arith.mulf %28, %28 : vector<36x1xf32>
    %31 = arith.addf %29, %30 : vector<36x1xf32>
    %c0_8 = arith.constant 0 : index
    %c0_9 = arith.constant 0 : index
    %32 = vector.load %arg5[%c0_8, %c0_9] : memref<36x54xf32, #tpu.memory_space<vmem>>, vector<36x54xf32>
    %33 = vector.extract_strided_slice %32 {offsets = [0, 0], sizes = [36, 18], strides = [1, 1]} : vector<36x54xf32> to vector<36x18xf32>
    %34 = vector.extract_strided_slice %32 {offsets = [0, 18], sizes = [36, 36], strides = [1, 1]} : vector<36x54xf32> to vector<36x36xf32>
    %35 = vector.broadcast %31 : vector<36x1xf32> to vector<36x18xf32>
    %36 = arith.mulf %35, %33 : vector<36x18xf32>
    %37 = vector.broadcast %27 : vector<36x1xf32> to vector<36x36xf32>
    %38 = arith.mulf %37, %34 : vector<36x36xf32>
    %39 = vector.broadcast %28 : vector<36x1xf32> to vector<36x36xf32>
    %40 = arith.mulf %39, %34 : vector<36x36xf32>
    %41 = tpu.concatenate %36, %38, %40 in 1 : vector<36x18xf32>, vector<36x36xf32>, vector<36x36xf32> -> vector<36x90xf32>
    %c0_10 = arith.constant 0 : index
    %c0_11 = arith.constant 0 : index
    %42 = vector.load %arg4[%c0_10, %c0_11] : memref<2x36xf32, #tpu.memory_space<vmem>>, vector<2x36xf32>
    %cst_12 = arith.constant dense<0.000000e+00> : vector<2x90xf32>
    %43 = tpu.matmul %42, %41, %cst_12 {dimension_numbers = #tpu.dot_dimension_numbers<[1], [0], [0], [1], [0, 0, 1, 1], [], []>} : vector<2x36xf32>, vector<36x90xf32>, vector<2x90xf32> -> vector<2x90xf32>
    %44 = vector.extract_strided_slice %43 {offsets = [0, 0], sizes = [2, 18], strides = [1, 1]} : vector<2x90xf32> to vector<2x18xf32>
    %45 = vector.extract_strided_slice %43 {offsets = [0, 18], sizes = [2, 18], strides = [1, 1]} : vector<2x90xf32> to vector<2x18xf32>
    %46 = vector.extract_strided_slice %43 {offsets = [0, 36], sizes = [2, 18], strides = [1, 1]} : vector<2x90xf32> to vector<2x18xf32>
    %47 = vector.extract_strided_slice %43 {offsets = [0, 54], sizes = [2, 18], strides = [1, 1]} : vector<2x90xf32> to vector<2x18xf32>
    %48 = vector.extract_strided_slice %43 {offsets = [0, 72], sizes = [2, 18], strides = [1, 1]} : vector<2x90xf32> to vector<2x18xf32>
    %cst_13 = arith.constant 5.000000e-01 : f32
    %49 = vector.broadcast %cst_13 : f32 to vector<2x18xf32>
    %50 = arith.mulf %49, %44 : vector<2x18xf32>
    %51 = arith.mulf %45, %46 : vector<2x18xf32>
    %52 = arith.mulf %47, %48 : vector<2x18xf32>
    %53 = arith.addf %51, %52 : vector<2x18xf32>
    %54 = arith.subf %50, %53 : vector<2x18xf32>
    %cst_14 = arith.constant dense<0.000000e+00> : vector<2xf32>
    %55 = vector.multi_reduction <add>, %54, %cst_14 [1] : vector<2x18xf32> to vector<2xf32>
    %56 = vector.shape_cast %55 : vector<2xf32> to vector<2x1xf32>
    %57 = tpu.iota {dimensions = array<i32: 1>} : vector<2x18xi32>
    %cst_15 = arith.constant 0.000000e+00 : f32
    %58 = vector.broadcast %cst_15 : f32 to vector<2x1xf32>
    %cst_16 = arith.constant dense<0x7F800000> : vector<2xf32>
    %59 = vector.multi_reduction <minimumf>, %54, %cst_16 [1] : vector<2x18xf32> to vector<2xf32>
    %60 = vector.shape_cast %59 : vector<2xf32> to vector<2x1xf32>
    %61 = vector.broadcast %60 : vector<2x1xf32> to vector<2x18xf32>
    %62 = arith.cmpf oeq, %54, %61 : vector<2x18xf32>
    %c18_i32 = arith.constant 18 : i32
    %63 = vector.broadcast %c18_i32 : i32 to vector<2x18xi32>
    %64 = arith.select %62, %57, %63 : vector<2x18xi1>, vector<2x18xi32>
    %cst_17 = arith.constant dense<2147483647> : vector<2xi32>
    %65 = vector.multi_reduction <minsi>, %64, %cst_17 [1] : vector<2x18xi32> to vector<2xi32>
    %66 = vector.shape_cast %65 : vector<2xi32> to vector<2x1xi32>
    %67 = arith.addf %58, %60 : vector<2x1xf32>
    %68 = vector.broadcast %66 : vector<2x1xi32> to vector<2x18xi32>
    %69 = arith.cmpi eq, %57, %68 : vector<2x18xi32>
    %cst_18 = arith.constant 0x7F800000 : f32
    %70 = vector.broadcast %cst_18 : f32 to vector<2x18xf32>
    %71 = arith.select %69, %70, %54 : vector<2x18xi1>, vector<2x18xf32>
    %cst_19 = arith.constant dense<0x7F800000> : vector<2xf32>
    %72 = vector.multi_reduction <minimumf>, %71, %cst_19 [1] : vector<2x18xf32> to vector<2xf32>
    %73 = vector.shape_cast %72 : vector<2xf32> to vector<2x1xf32>
    %74 = vector.broadcast %73 : vector<2x1xf32> to vector<2x18xf32>
    %75 = arith.cmpf oeq, %71, %74 : vector<2x18xf32>
    %c18_i32_20 = arith.constant 18 : i32
    %76 = vector.broadcast %c18_i32_20 : i32 to vector<2x18xi32>
    %77 = arith.select %75, %57, %76 : vector<2x18xi1>, vector<2x18xi32>
    %cst_21 = arith.constant dense<2147483647> : vector<2xi32>
    %78 = vector.multi_reduction <minsi>, %77, %cst_21 [1] : vector<2x18xi32> to vector<2xi32>
    %79 = vector.shape_cast %78 : vector<2xi32> to vector<2x1xi32>
    %80 = arith.addf %67, %73 : vector<2x1xf32>
    %81 = vector.broadcast %79 : vector<2x1xi32> to vector<2x18xi32>
    %82 = arith.cmpi eq, %57, %81 : vector<2x18xi32>
    %cst_22 = arith.constant 0x7F800000 : f32
    %83 = vector.broadcast %cst_22 : f32 to vector<2x18xf32>
    %84 = arith.select %82, %83, %71 : vector<2x18xi1>, vector<2x18xf32>
    %cst_23 = arith.constant dense<0x7F800000> : vector<2xf32>
    %85 = vector.multi_reduction <minimumf>, %84, %cst_23 [1] : vector<2x18xf32> to vector<2xf32>
    %86 = vector.shape_cast %85 : vector<2xf32> to vector<2x1xf32>
    %87 = arith.addf %80, %86 : vector<2x1xf32>
    %88 = arith.subf %56, %87 : vector<2x1xf32>
    %cst_24 = arith.constant 0.0666666701 : f32
    %89 = vector.broadcast %cst_24 : f32 to vector<2x1xf32>
    %90 = arith.mulf %88, %89 : vector<2x1xf32>
    %c0_25 = arith.constant 0 : index
    %c0_26 = arith.constant 0 : index
    %c0_27 = arith.constant 0 : index
    %91 = vector.load %arg6[%c0_25, %c0_26, %c0_27] : memref<1x2x1xf32, #tpu.memory_space<vmem>>, vector<1x2x1xf32>
    %92 = vector.shape_cast %91 : vector<1x2x1xf32> to vector<2x1xf32>
    %93 = vector.shape_cast %90 : vector<2x1xf32> to vector<1x2x1xf32>
    tpu.vector_store %arg6[%c0_25, %c0_26, %c0_27], %93 {strides = array<i32>} : memref<1x2x1xf32, #tpu.memory_space<vmem>>, vector<1x2x1xf32>,
    return
  }
  func.func @transform_0(%arg0: i32) -> (i32, i32) {
    %c0_i32 = arith.constant 0 : i32
    %c0_i32_0 = arith.constant 0 : i32
    return %arg0, %c0_i32 : i32, i32
  }
  func.func @transform_1(%arg0: i32) -> (i32, i32) {
    %c0_i32 = arith.constant 0 : i32
    %c0_i32_0 = arith.constant 0 : i32
    return %arg0, %c0_i32 : i32, i32
  }
  func.func @transform_2(%arg0: i32) -> (i32, i32) {
    %c0_i32 = arith.constant 0 : i32
    %c0_i32_0 = arith.constant 0 : i32
    %c0_i32_1 = arith.constant 0 : i32
    return %c0_i32, %c0_i32_0 : i32, i32
  }
  func.func @transform_3(%arg0: i32) -> (i32, i32) {
    %c0_i32 = arith.constant 0 : i32
    %c0_i32_0 = arith.constant 0 : i32
    %c0_i32_1 = arith.constant 0 : i32
    return %c0_i32, %c0_i32_0 : i32, i32
  }
  func.func @transform_4(%arg0: i32) -> (i32, i32) {
    %c0_i32 = arith.constant 0 : i32
    %c0_i32_0 = arith.constant 0 : i32
    %c0_i32_1 = arith.constant 0 : i32
    return %c0_i32, %c0_i32_0 : i32, i32
  }
  func.func @transform_5(%arg0: i32) -> (i32, i32, i32) {
    %c0_i32 = arith.constant 0 : i32
    %c0_i32_0 = arith.constant 0 : i32
    %c0_i32_1 = arith.constant 0 : i32
    return %arg0, %c0_i32, %c0_i32_0 : i32, i32, i32
  }
}

</mosaic_0001>

<llo_original>
// kernel: edge_ohkm_mse_loss.1
$region0: #{edge_ohkm_mse_loss.1}
  #allocation0 [shape = 'u32[]', space=smem, size = 0x4, offset = 0x4, fixed_abs, tag = 'smem constant byte address 0x4 - core index']
  #allocation1 [shape = 'u32[144,128]{1,0:T(1,128)}', space=vmem, size = 0x12000, scoped, tag = 'internal scratch']
  %s0 = inlined_call_operand.vmem [shape: f32[36,256], index: 0, kind: input, shape index: {}]
  %s1 = inlined_call_operand.vmem [shape: f32[36,256], index: 1, kind: input, shape index: {}]
  %s2 = inlined_call_operand.vmem [shape: f32[256,4], index: 2, kind: input, shape index: {}]
  %s3 = inlined_call_operand.vmem [shape: f32[2,36], index: 3, kind: input, shape index: {}]
  %s4 = inlined_call_operand.vmem [shape: f32[36,54], index: 4, kind: input, shape index: {}]
  %s5 = inlined_call_operand.vmem [shape: f32[1,2,1], index: 5, kind: output, shape index: {}]
  %s6 = sld [smem:[#allocation0]]
  $region30: #{edge_ohkm_mse_loss.1} parent=0
    _
  %s8 = ssub.s32 1, %s6
  %s9 = scalar_select 0, %s8, %s6
  // Predicated region
  $region2: #{edge_ohkm_mse_loss.1} parent=0 // pred_check
    _
  $region3: #{edge_ohkm_mse_loss.1} parent=0 // pred_check_branch
    %11 = sbr.rel (0) target = $region5
  $region4: #{edge_ohkm_mse_loss.1} parent=0 // pred_region
    _
  $region5: #{edge_ohkm_mse_loss.1} parent=0 // pred_fallthru
    _
  // Predicated region
  $region6: #{edge_ohkm_mse_loss.1} parent=0 // pred_check
    _
  $region7: #{edge_ohkm_mse_loss.1} parent=0 // pred_check_branch
    %13 = sbr.rel (0) target = $region9
  $region8: #{edge_ohkm_mse_loss.1} parent=0 // pred_region
    _
  $region9: #{edge_ohkm_mse_loss.1} parent=0 // pred_fallthru
    _
  // Predicated region
  $region10: #{edge_ohkm_mse_loss.1} parent=0 // pred_check
    _
  $region11: #{edge_ohkm_mse_loss.1} parent=0 // pred_check_branch
    %15 = sbr.rel (0) target = $region13
  $region12: #{edge_ohkm_mse_loss.1} parent=0 // pred_region
    _
  $region13: #{edge_ohkm_mse_loss.1} parent=0 // pred_fallthru
    _
  // Predicated region
  $region14: #{edge_ohkm_mse_loss.1} parent=0 // pred_check
    _
  $region15: #{edge_ohkm_mse_loss.1} parent=0 // pred_check_branch
    %17 = sbr.rel (0) target = $region17
  $region16: #{edge_ohkm_mse_loss.1} parent=0 // pred_region
    _
  $region17: #{edge_ohkm_mse_loss.1} parent=0 // pred_fallthru
    _
  // Predicated region
  $region18: #{edge_ohkm_mse_loss.1} parent=0 // pred_check
    _
  $region19: #{edge_ohkm_mse_loss.1} parent=0 // pred_check_branch
    %19 = sbr.rel (0) target = $region21
  $region20: #{edge_ohkm_mse_loss.1} parent=0 // pred_region
    _
  $region21: #{edge_ohkm_mse_loss.1} parent=0 // pred_fallthru
    _
  %v20 = vld [vmem:[%s2] sm:$0xff]
  %v21 = vld [vmem:[%s2 + $0x8] sm:$0xff]
  %v22 = vld [vmem:[%s2 + $0x10] sm:$0xff]
  %v23 = vld [vmem:[%s2 + $0x18] sm:$0xff]
  %v24 = vld [vmem:[%s2 + $0x20] sm:$0xff]
  %v25 = vld [vmem:[%s2 + $0x28] sm:$0xff]
  %v26 = vld [vmem:[%s2 + $0x30] sm:$0xff]
  %v27 = vld [vmem:[%s2 + $0x38] sm:$0xff]
  %v28 = vld [vmem:[%s2 + $0x40] sm:$0xff]
  %v29 = vld [vmem:[%s2 + $0x48] sm:$0xff]
  %v30 = vld [vmem:[%s2 + $0x50] sm:$0xff]
  %v31 = vld [vmem:[%s2 + $0x58] sm:$0xff]
  %v32 = vld [vmem:[%s2 + $0x60] sm:$0xff]
  %v33 = vld [vmem:[%s2 + $0x68] sm:$0xff]
  %v34 = vld [vmem:[%s2 + $0x70] sm:$0xff]
  %v35 = vld [vmem:[%s2 + $0x78] sm:$0xff]
  %v36 = vld [vmem:[%s2 + $0x80] sm:$0xff]
  %v37 = vld [vmem:[%s2 + $0x88] sm:$0xff]
  %v38 = vld [vmem:[%s2 + $0x90] sm:$0xff]
  %v39 = vld [vmem:[%s2 + $0x98] sm:$0xff]
  %v40 = vld [vmem:[%s2 + $0xa0] sm:$0xff]
  %v41 = vld [vmem:[%s2 + $0xa8] sm:$0xff]
  %v42 = vld [vmem:[%s2 + $0xb0] sm:$0xff]
  %v43 = vld [vmem:[%s2 + $0xb8] sm:$0xff]
  %v44 = vld [vmem:[%s2 + $0xc0] sm:$0xff]
  %v45 = vld [vmem:[%s2 + $0xc8] sm:$0xff]
  %v46 = vld [vmem:[%s2 + $0xd0] sm:$0xff]
  %v47 = vld [vmem:[%s2 + $0xd8] sm:$0xff]
  %v48 = vld [vmem:[%s2 + $0xe0] sm:$0xff]
  %v49 = vld [vmem:[%s2 + $0xe8] sm:$0xff]
  %v50 = vld [vmem:[%s2 + $0xf0] sm:$0xff]
  %v51 = vld [vmem:[%s2 + $0xf8] sm:$0xff]
  %v52 = vld [vmem:[%s0] sm:$0xff]
  %v53 = vld [vmem:[%s0 + $0x8] sm:$0xff]
  %v54 = vld [vmem:[%s0 + $0x10] sm:$0xff]
  %v55 = vld [vmem:[%s0 + $0x18] sm:$0xff]
  %v56 = vld [vmem:[%s0 + $0x20] sm:$0xff]
  %v57 = vld [vmem:[%s0 + $0x28] sm:$0xff]
  %v58 = vld [vmem:[%s0 + $0x30] sm:$0xff]
  %v59 = vld [vmem:[%s0 + $0x38] sm:$0xff]
  %v60 = vld [vmem:[%s0 + $0x40] sm:$0xf]
  %v61 = vld [vmem:[%s0 + $0x48] sm:$0xf]
  %v62 = vmax.f32 %v52, %v53
  %63 = vmax.xlane.f32.xlu0 %v62
  %v64 = vpop.xlane.xlu0 %63
  %v65 = vmax.f32 %v54, %v55
  %66 = vmax.xlane.f32.xlu0 %v65
  %v67 = vpop.xlane.xlu0 %66
  %v68 = vmax.f32 %v56, %v57
  %69 = vmax.xlane.f32.xlu0 %v68
  %v70 = vpop.xlane.xlu0 %69
  %v71 = vmax.f32 %v58, %v59
  %72 = vmax.xlane.f32.xlu0 %v71
  %v73 = vpop.xlane.xlu0 %72
  %vm74 = vcmask 1043456
  %v75 = vsel %vm74, %v60, -inf
  %v76 = vsel %vm74, %v61, -inf
  %v77 = vmax.f32 %v75, %v76
  %78 = vmax.xlane.f32.xlu0 %v77
  %v79 = vpop.xlane.xlu0 %78
  %v80 = vsub.f32 %v52, %v64
  %v81 = vsub.f32 %v53, %v64
  %v82 = vsub.f32 %v54, %v67
  %v83 = vsub.f32 %v55, %v67
  %v84 = vsub.f32 %v56, %v70
  %v85 = vsub.f32 %v57, %v70
  %v86 = vsub.f32 %v58, %v73
  %v87 = vsub.f32 %v59, %v73
  %v88 = vsub.f32 %v60, %v79
  %v89 = vsub.f32 %v61, %v79
  %v90 = vmul.f32 %v80, 1.442695
  %v91 = vpow.pop %v90
  %v92 = vmul.f32 %v81, 1.442695
  %v93 = vpow.pop %v92
  %v94 = vmul.f32 %v82, 1.442695
  %v95 = vpow.pop %v94
  %v96 = vmul.f32 %v83, 1.442695
  %v97 = vpow.pop %v96
  %v98 = vmul.f32 %v84, 1.442695
  %v99 = vpow.pop %v98
  %v100 = vmul.f32 %v85, 1.442695
  %v101 = vpow.pop %v100
  %v102 = vmul.f32 %v86, 1.442695
  %v103 = vpow.pop %v102
  %v104 = vmul.f32 %v87, 1.442695
  %v105 = vpow.pop %v104
  %v106 = vmul.f32 %v88, 1.442695
  %v107 = vpow.pop %v106
  %v108 = vmul.f32 %v89, 1.442695
  %v109 = vpow.pop %v108
  %110 = vmatprep.subr.mxu0 0.0
  %111 = vmatpush1.msra.mxu0 %v20
  %112 = vmatprep.subr.mxu0 0.0
  %113 = vmatpush1.msra.mxu0 %v21
  %114 = vmatprep.subr.mxu0 0.0
  %115 = vmatpush1.msra.mxu0 %v22
  %116 = vmatprep.subr.mxu0 0.0
  %117 = vmatpush1.msra.mxu0 %v23
  %118 = vmatprep.subr.mxu0 0.0
  %119 = vmatpush1.msra.mxu0 %v24
  %120 = vmatprep.subr.mxu0 0.0
  %121 = vmatpush1.msra.mxu0 %v25
  %122 = vmatprep.subr.mxu0 0.0
  %123 = vmatpush1.msra.mxu0 %v26
  %124 = vmatprep.subr.mxu0 0.0
  %125 = vmatpush1.msra.mxu0 %v27
  %126 = vmatprep.subr.mxu0 0.0
  %127 = vmatpush1.msra.mxu0 %v28
  %128 = vmatprep.subr.mxu0 0.0
  %129 = vmatpush1.msra.mxu0 %v29
  %130 = vmatprep.subr.mxu0 0.0
  %131 = vmatpush1.msra.mxu0 %v30
  %132 = vmatprep.subr.mxu0 0.0
  %133 = vmatpush1.msra.mxu0 %v31
  %134 = vmatprep.subr.mxu0 0.0
  %135 = vmatpush1.msra.mxu0 %v32
  %136 = vmatprep.subr.mxu0 0.0
  %137 = vmatpush1.msra.mxu0 %v33
  %138 = vmatprep.subr.mxu0 0.0
  %139 = vmatpush1.msra.mxu0 %v34
  %140 = vmatprep.subr.mxu0 0.0
  %141 = vmatpush1.msra.mxu0 %v35
  %142 = vmatprep.subr.mxu0 0.0
  %143 = vmatpush1.msra.mxu0 %v36
  %144 = vmatprep.subr.mxu0 0.0
  %145 = vmatpush1.msra.mxu0 %v37
  %146 = vmatprep.subr.mxu0 0.0
  %147 = vmatpush1.msra.mxu0 %v38
  %148 = vmatprep.subr.mxu0 0.0
  %149 = vmatpush1.msra.mxu0 %v39
  %150 = vmatprep.subr.mxu0 0.0
  %151 = vmatpush1.msra.mxu0 %v40
  %152 = vmatprep.subr.mxu0 0.0
  %153 = vmatpush1.msra.mxu0 %v41
  %154 = vmatprep.subr.mxu0 0.0
  %155 = vmatpush1.msra.mxu0 %v42
  %156 = vmatprep.subr.mxu0 0.0
  %157 = vmatpush1.msra.mxu0 %v43
  %158 = vmatprep.subr.mxu0 0.0
  %159 = vmatpush1.msra.mxu0 %v44
  %160 = vmatprep.subr.mxu0 0.0
  %161 = vmatpush1.msra.mxu0 %v45
  %162 = vmatprep.subr.mxu0 0.0
  %163 = vmatpush1.msra.mxu0 %v46
  %164 = vmatprep.subr.mxu0 0.0
  %165 = vmatpush1.msra.mxu0 %v47
  %166 = vmatprep.subr.mxu0 0.0
  %167 = vmatpush1.msra.mxu0 %v48
  %168 = vmatprep.subr.mxu0 0.0
  %169 = vmatpush1.msra.mxu0 %v49
  %170 = vmatprep.subr.mxu0 0.0
  %171 = vmatpush1.msra.mxu0 %v50
  %172 = vmatprep.subr.mxu0 0.0
  %173 = vmatpush1.msra.mxu0 %v51
  %174 = vmatprep.mubr.f32.mxu0 %v93
  %175 = vmatmul.mubr.f32.gmra.mrb[0].mxu0 %v91
  %v176 = vpop.f32.mrb[0].mxu0
  %v177 = vadd.f32 0.0, %v176
  %v178 = vpop.f32.mrb[0].mxu0
  %179 = vmatprep.mubr.f32.mxu0 %v97
  %180 = vmatmul.mubr.f32.gmra.mrb[0].mxu0 %v95
  %v181 = vpop.f32.mrb[0].mxu0
  %v182 = vadd.f32 0.0, %v181
  %v183 = vpop.f32.mrb[0].mxu0
  %184 = vmatprep.mubr.f32.mxu0 %v101
  %185 = vmatmul.mubr.f32.gmra.mrb[0].mxu0 %v99
  %v186 = vpop.f32.mrb[0].mxu0
  %v187 = vadd.f32 0.0, %v186
  %v188 = vpop.f32.mrb[0].mxu0
  %189 = vmatprep.mubr.f32.mxu0 %v105
  %190 = vmatmul.mubr.f32.gmra.mrb[0].mxu0 %v103
  %v191 = vpop.f32.mrb[0].mxu0
  %v192 = vadd.f32 0.0, %v191
  %v193 = vpop.f32.mrb[0].mxu0
  %194 = vmatprep.mubr.f32.mxu0 %v109
  %195 = vmatmul.mubr.f32.gmra.mrb[0].mxu0 %v107
  %v196 = vpop.f32.mrb[0].mxu0
  %v197 = vadd.f32 0.0, %v196
  %v198 = vpop.f32.mrb[0].mxu0
  %199 = vdwg.mxu0
  %v200 = vrcp.pop %v177
  %v201 = vrcp.pop %v182
  %v202 = vrcp.pop %v187
  %v203 = vrcp.pop %v192
  %v204 = vrcp.pop %v197
  %210 = vrot.lane.b32.xlu0 %v200, 1
  %v211 = vpop.permute.xlu0 %210
  %212 = vrot.lane.b32.xlu0 %v201, 1
  %v213 = vpop.permute.xlu0 %212
  %214 = vrot.lane.b32.xlu0 %v202, 1
  %v215 = vpop.permute.xlu0 %214
  %216 = vrot.lane.b32.xlu0 %v203, 1
  %v217 = vpop.permute.xlu0 %216
  %218 = vrot.lane.b32.xlu0 %v204, 1
  %v219 = vpop.permute.xlu0 %218
  %v225 = vmul.f32 %v177, %v211
  %v226 = vmul.f32 %v182, %v213
  %v227 = vmul.f32 %v187, %v215
  %v228 = vmul.f32 %v192, %v217
  %v229 = vmul.f32 %v197, %v219
  %230 = vrot.lane.b32.xlu0 %v200, 2
  %v231 = vpop.permute.xlu0 %230
  %232 = vrot.lane.b32.xlu0 %v201, 2
  %v233 = vpop.permute.xlu0 %232
  %234 = vrot.lane.b32.xlu0 %v202, 2
  %v235 = vpop.permute.xlu0 %234
  %236 = vrot.lane.b32.xlu0 %v203, 2
  %v237 = vpop.permute.xlu0 %236
  %238 = vrot.lane.b32.xlu0 %v204, 2
  %v239 = vpop.permute.xlu0 %238
  %v245 = vmul.f32 %v177, %v231
  %v246 = vmul.f32 %v182, %v233
  %v247 = vmul.f32 %v187, %v235
  %v248 = vmul.f32 %v192, %v237
  %v249 = vmul.f32 %v197, %v239
  %v250 = vld [vmem:[%s1] sm:$0xff]
  %v251 = vld [vmem:[%s1 + $0x8] sm:$0xff]
  %v252 = vld [vmem:[%s1 + $0x10] sm:$0xff]
  %v253 = vld [vmem:[%s1 + $0x18] sm:$0xff]
  %v254 = vld [vmem:[%s1 + $0x20] sm:$0xff]
  %v255 = vld [vmem:[%s1 + $0x28] sm:$0xff]
  %v256 = vld [vmem:[%s1 + $0x30] sm:$0xff]
  %v257 = vld [vmem:[%s1 + $0x38] sm:$0xff]
  %v258 = vld [vmem:[%s1 + $0x40] sm:$0xf]
  %v259 = vld [vmem:[%s1 + $0x48] sm:$0xf]
  %v260 = vmax.f32 %v250, %v251
  %261 = vmax.xlane.f32.xlu0 %v260
  %v262 = vpop.xlane.xlu0 %261
  %v263 = vmax.f32 %v252, %v253
  %264 = vmax.xlane.f32.xlu0 %v263
  %v265 = vpop.xlane.xlu0 %264
  %v266 = vmax.f32 %v254, %v255
  %267 = vmax.xlane.f32.xlu0 %v266
  %v268 = vpop.xlane.xlu0 %267
  %v269 = vmax.f32 %v256, %v257
  %270 = vmax.xlane.f32.xlu0 %v269
  %v271 = vpop.xlane.xlu0 %270
  %v272 = vsel %vm74, %v258, -inf
  %v273 = vsel %vm74, %v259, -inf
  %v274 = vmax.f32 %v272, %v273
  %275 = vmax.xlane.f32.xlu0 %v274
  %v276 = vpop.xlane.xlu0 %275
  %v277 = vsub.f32 %v250, %v262
  %v278 = vsub.f32 %v251, %v262
  %v279 = vsub.f32 %v252, %v265
  %v280 = vsub.f32 %v253, %v265
  %v281 = vsub.f32 %v254, %v268
  %v282 = vsub.f32 %v255, %v268
  %v283 = vsub.f32 %v256, %v271
  %v284 = vsub.f32 %v257, %v271
  %v285 = vsub.f32 %v258, %v276
  %v286 = vsub.f32 %v259, %v276
  %v287 = vmul.f32 %v277, 1.442695
  %v288 = vpow.pop %v287
  %v289 = vmul.f32 %v278, 1.442695
  %v290 = vpow.pop %v289
  %v291 = vmul.f32 %v279, 1.442695
  %v292 = vpow.pop %v291
  %v293 = vmul.f32 %v280, 1.442695
  %v294 = vpow.pop %v293
  %v295 = vmul.f32 %v281, 1.442695
  %v296 = vpow.pop %v295
  %v297 = vmul.f32 %v282, 1.442695
  %v298 = vpow.pop %v297
  %v299 = vmul.f32 %v283, 1.442695
  %v300 = vpow.pop %v299
  %v301 = vmul.f32 %v284, 1.442695
  %v302 = vpow.pop %v301
  %v303 = vmul.f32 %v285, 1.442695
  %v304 = vpow.pop %v303
  %v305 = vmul.f32 %v286, 1.442695
  %v306 = vpow.pop %v305
  %307 = vmatprep.subr.mxu0 0.0
  %308 = vmatpush1.msra.mxu0 %v20
  %309 = vmatprep.subr.mxu0 0.0
  %310 = vmatpush1.msra.mxu0 %v21
  %311 = vmatprep.subr.mxu0 0.0
  %312 = vmatpush1.msra.mxu0 %v22
  %313 = vmatprep.subr.mxu0 0.0
  %314 = vmatpush1.msra.mxu0 %v23
  %315 = vmatprep.subr.mxu0 0.0
  %316 = vmatpush1.msra.mxu0 %v24
  %317 = vmatprep.subr.mxu0 0.0
  %318 = vmatpush1.msra.mxu0 %v25
  %319 = vmatprep.subr.mxu0 0.0
  %320 = vmatpush1.msra.mxu0 %v26
  %321 = vmatprep.subr.mxu0 0.0
  %322 = vmatpush1.msra.mxu0 %v27
  %323 = vmatprep.subr.mxu0 0.0
  %324 = vmatpush1.msra.mxu0 %v28
  %325 = vmatprep.subr.mxu0 0.0
  %326 = vmatpush1.msra.mxu0 %v29
  %327 = vmatprep.subr.mxu0 0.0
  %328 = vmatpush1.msra.mxu0 %v30
  %329 = vmatprep.subr.mxu0 0.0
  %330 = vmatpush1.msra.mxu0 %v31
  %331 = vmatprep.subr.mxu0 0.0
  %332 = vmatpush1.msra.mxu0 %v32
  %333 = vmatprep.subr.mxu0 0.0
  %334 = vmatpush1.msra.mxu0 %v33
  %335 = vmatprep.subr.mxu0 0.0
  %336 = vmatpush1.msra.mxu0 %v34
  %337 = vmatprep.subr.mxu0 0.0
  %338 = vmatpush1.msra.mxu0 %v35
  %339 = vmatprep.subr.mxu0 0.0
  %340 = vmatpush1.msra.mxu0 %v36
  %341 = vmatprep.subr.mxu0 0.0
  %342 = vmatpush1.msra.mxu0 %v37
  %343 = vmatprep.subr.mxu0 0.0
  %344 = vmatpush1.msra.mxu0 %v38
  %345 = vmatprep.subr.mxu0 0.0
  %346 = vmatpush1.msra.mxu0 %v39
  %347 = vmatprep.subr.mxu0 0.0
  %348 = vmatpush1.msra.mxu0 %v40
  %349 = vmatprep.subr.mxu0 0.0
  %350 = vmatpush1.msra.mxu0 %v41
  %351 = vmatprep.subr.mxu0 0.0
  %352 = vmatpush1.msra.mxu0 %v42
  %353 = vmatprep.subr.mxu0 0.0
  %354 = vmatpush1.msra.mxu0 %v43
  %355 = vmatprep.subr.mxu0 0.0
  %356 = vmatpush1.msra.mxu0 %v44
  %357 = vmatprep.subr.mxu0 0.0
  %358 = vmatpush1.msra.mxu0 %v45
  %359 = vmatprep.subr.mxu0 0.0
  %360 = vmatpush1.msra.mxu0 %v46
  %361 = vmatprep.subr.mxu0 0.0
  %362 = vmatpush1.msra.mxu0 %v47
  %363 = vmatprep.subr.mxu0 0.0
  %364 = vmatpush1.msra.mxu0 %v48
  %365 = vmatprep.subr.mxu0 0.0
  %366 = vmatpush1.msra.mxu0 %v49
  %367 = vmatprep.subr.mxu0 0.0
  %368 = vmatpush1.msra.mxu0 %v50
  %369 = vmatprep.subr.mxu0 0.0
  %370 = vmatpush1.msra.mxu0 %v51
  %371 = vmatprep.mubr.f32.mxu0 %v290
  %372 = vmatmul.mubr.f32.gmra.mrb[0].mxu0 %v288
  %v373 = vpop.f32.mrb[0].mxu0
  %v374 = vadd.f32 0.0, %v373
  %v375 = vpop.f32.mrb[0].mxu0
  %376 = vmatprep.mubr.f32.mxu0 %v294
  %377 = vmatmul.mubr.f32.gmra.mrb[0].mxu0 %v292
  %v378 = vpop.f32.mrb[0].mxu0
  %v379 = vadd.f32 0.0, %v378
  %v380 = vpop.f32.mrb[0].mxu0
  %381 = vmatprep.mubr.f32.mxu0 %v298
  %382 = vmatmul.mubr.f32.gmra.mrb[0].mxu0 %v296
  %v383 = vpop.f32.mrb[0].mxu0
  %v384 = vadd.f32 0.0, %v383
  %v385 = vpop.f32.mrb[0].mxu0
  %386 = vmatprep.mubr.f32.mxu0 %v302
  %387 = vmatmul.mubr.f32.gmra.mrb[0].mxu0 %v300
  %v388 = vpop.f32.mrb[0].mxu0
  %v389 = vadd.f32 0.0, %v388
  %v390 = vpop.f32.mrb[0].mxu0
  %391 = vmatprep.mubr.f32.mxu0 %v306
  %392 = vmatmul.mubr.f32.gmra.mrb[0].mxu0 %v304
  %v393 = vpop.f32.mrb[0].mxu0
  %v394 = vadd.f32 0.0, %v393
  %v395 = vpop.f32.mrb[0].mxu0
  %396 = vdwg.mxu0
  %v397 = vrcp.pop %v374
  %v398 = vrcp.pop %v379
  %v399 = vrcp.pop %v384
  %v400 = vrcp.pop %v389
  %v401 = vrcp.pop %v394
  %407 = vrot.lane.b32.xlu0 %v397, 1
  %v408 = vpop.permute.xlu0 %407
  %409 = vrot.lane.b32.xlu0 %v398, 1
  %v410 = vpop.permute.xlu0 %409
  %411 = vrot.lane.b32.xlu0 %v399, 1
  %v412 = vpop.permute.xlu0 %411
  %413 = vrot.lane.b32.xlu0 %v400, 1
  %v414 = vpop.permute.xlu0 %413
  %415 = vrot.lane.b32.xlu0 %v401, 1
  %v416 = vpop.permute.xlu0 %415
  %v422 = vmul.f32 %v374, %v408
  %v423 = vmul.f32 %v379, %v410
  %v424 = vmul.f32 %v384, %v412
  %v425 = vmul.f32 %v389, %v414
  %v426 = vmul.f32 %v394, %v416
  %427 = vrot.lane.b32.xlu0 %v397, 2
  %v428 = vpop.permute.xlu0 %427
  %429 = vrot.lane.b32.xlu0 %v398, 2
  %v430 = vpop.permute.xlu0 %429
  %431 = vrot.lane.b32.xlu0 %v399, 2
  %v432 = vpop.permute.xlu0 %431
  %433 = vrot.lane.b32.xlu0 %v400, 2
  %v434 = vpop.permute.xlu0 %433
  %435 = vrot.lane.b32.xlu0 %v401, 2
  %v436 = vpop.permute.xlu0 %435
  %v442 = vmul.f32 %v374, %v428
  %v443 = vmul.f32 %v379, %v430
  %v444 = vmul.f32 %v384, %v432
  %v445 = vmul.f32 %v389, %v434
  %v446 = vmul.f32 %v394, %v436
  %v447 = vsub.f32 %v225, %v422
  %v448 = vsub.f32 %v226, %v423
  %v449 = vsub.f32 %v227, %v424
  %v450 = vsub.f32 %v228, %v425
  %v451 = vsub.f32 %v229, %v426
  %v452 = vsub.f32 %v245, %v442
  %v453 = vsub.f32 %v246, %v443
  %v454 = vsub.f32 %v247, %v444
  %v455 = vsub.f32 %v248, %v445
  %v456 = vsub.f32 %v249, %v446
  %v457 = vmul.f32 %v447, %v447
  %v458 = vmul.f32 %v448, %v448
  %v459 = vmul.f32 %v449, %v449
  %v460 = vmul.f32 %v450, %v450
  %v461 = vmul.f32 %v451, %v451
  %v462 = vmul.f32 %v452, %v452
  %v463 = vmul.f32 %v453, %v453
  %v464 = vmul.f32 %v454, %v454
  %v465 = vmul.f32 %v455, %v455
  %v466 = vmul.f32 %v456, %v456
  %472 = vrot.lane.b32.xlu0 %v462, 127
  %v473 = vpop.permute.xlu0 %472
  %474 = vrot.lane.b32.xlu0 %v463, 127
  %v475 = vpop.permute.xlu0 %474
  %476 = vrot.lane.b32.xlu0 %v464, 127
  %v477 = vpop.permute.xlu0 %476
  %478 = vrot.lane.b32.xlu0 %v465, 127
  %v479 = vpop.permute.xlu0 %478
  %480 = vrot.lane.b32.xlu0 %v466, 127
  %v481 = vpop.permute.xlu0 %480
  %v487 = vadd.f32 %v457, %v473
  %v488 = vadd.f32 %v458, %v475
  %v489 = vadd.f32 %v459, %v477
  %v490 = vadd.f32 %v460, %v479
  %v491 = vadd.f32 %v461, %v481
  %v492 = vld [vmem:[%s4] sm:$0xff]
  %v493 = vld [vmem:[%s4 + $0x8] sm:$0xff]
  %v494 = vld [vmem:[%s4 + $0x10] sm:$0xff]
  %v495 = vld [vmem:[%s4 + $0x18] sm:$0xff]
  %v496 = vld [vmem:[%s4 + $0x20] sm:$0xf]
  %498 = vset.pattern.permute.xlu0 1
  %499 = vperm.xlu0 %498, %v487
  %v500 = vpop.permute.xlu0 %499
  %503 = vset.pattern.permute.xlu0 1
  %504 = vperm.xlu0 %503, %v488
  %v505 = vpop.permute.xlu0 %504
  %508 = vset.pattern.permute.xlu0 1
  %509 = vperm.xlu0 %508, %v489
  %v510 = vpop.permute.xlu0 %509
  %513 = vset.pattern.permute.xlu0 1
  %514 = vperm.xlu0 %513, %v490
  %v515 = vpop.permute.xlu0 %514
  %518 = vset.pattern.permute.xlu0 1
  %519 = vperm.xlu0 %518, %v491
  %v520 = vpop.permute.xlu0 %519
  %v522 = vmul.f32 %v500, %v492
  %v523 = vmul.f32 %v505, %v493
  %v524 = vmul.f32 %v510, %v494
  %v525 = vmul.f32 %v515, %v495
  %v526 = vmul.f32 %v520, %v496
  %528 = vset.pattern.permute.xlu0 1
  %529 = vperm.xlu0 %528, %v447
  %v530 = vpop.permute.xlu0 %529
  %533 = vset.pattern.permute.xlu0 1
  %534 = vperm.xlu0 %533, %v448
  %v535 = vpop.permute.xlu0 %534
  %538 = vset.pattern.permute.xlu0 1
  %539 = vperm.xlu0 %538, %v449
  %v540 = vpop.permute.xlu0 %539
  %543 = vset.pattern.permute.xlu0 1
  %544 = vperm.xlu0 %543, %v450
  %v545 = vpop.permute.xlu0 %544
  %548 = vset.pattern.permute.xlu0 1
  %549 = vperm.xlu0 %548, %v451
  %v550 = vpop.permute.xlu0 %549
  %v552 = vmul.f32 %v530, %v492
  %v553 = vmul.f32 %v535, %v493
  %v554 = vmul.f32 %v540, %v494
  %v555 = vmul.f32 %v545, %v495
  %v556 = vmul.f32 %v550, %v496
  %558 = vset.pattern.permute.xlu0 2
  %559 = vperm.xlu0 %558, %v452
  %v560 = vpop.permute.xlu0 %559
  %563 = vset.pattern.permute.xlu0 2
  %564 = vperm.xlu0 %563, %v453
  %v565 = vpop.permute.xlu0 %564
  %568 = vset.pattern.permute.xlu0 2
  %569 = vperm.xlu0 %568, %v454
  %v570 = vpop.permute.xlu0 %569
  %573 = vset.pattern.permute.xlu0 2
  %574 = vperm.xlu0 %573, %v455
  %v575 = vpop.permute.xlu0 %574
  %578 = vset.pattern.permute.xlu0 2
  %579 = vperm.xlu0 %578, %v456
  %v580 = vpop.permute.xlu0 %579
  %v582 = vmul.f32 %v560, %v492
  %v583 = vmul.f32 %v565, %v493
  %v584 = vmul.f32 %v570, %v494
  %v585 = vmul.f32 %v575, %v495
  %v586 = vmul.f32 %v580, %v496
  %592 = vrot.lane.b32.xlu0 %v582, 36
  %v593 = vpop.permute.xlu0 %592
  %594 = vrot.lane.b32.xlu0 %v583, 36
  %v595 = vpop.permute.xlu0 %594
  %596 = vrot.lane.b32.xlu0 %v584, 36
  %v597 = vpop.permute.xlu0 %596
  %598 = vrot.lane.b32.xlu0 %v585, 36
  %v599 = vpop.permute.xlu0 %598
  %600 = vrot.lane.b32.xlu0 %v586, 36
  %v601 = vpop.permute.xlu0 %600
  %vm607 = vcmask 146432
  %v608 = vsel %vm607, %v522, %v552
  %v609 = vsel %vm607, %v523, %v553
  %v610 = vsel %vm607, %v524, %v554
  %v611 = vsel %vm607, %v525, %v555
  %v612 = vsel %vm607, %v526, %v556
  %vm613 = vcmask 441344
  %v614 = vsel %vm613, %v608, %v593
  %v615 = vsel %vm613, %v609, %v595
  %v616 = vsel %vm613, %v610, %v597
  %v617 = vsel %vm613, %v611, %v599
  %v618 = vsel %vm613, %v612, %v601
  %v619 = vld [vmem:[%s3] sm:$0x3]
  %vm620 = vcmask 293888
  %v622 = vsel %vm620, %v619, 0
  %v625 = vsel %vm74, %v618, 0
  %627 = vmatprep.subr.mxu0 0.0
  %628 = vmatpush1.msra.mxu0 %v614
  %629 = vmatprep.subr.mxu0 0.0
  %630 = vmatpush1.msra.mxu0 %v615
  %631 = vmatprep.subr.mxu0 0.0
  %632 = vmatpush1.msra.mxu0 %v616
  %633 = vmatprep.subr.mxu0 0.0
  %634 = vmatpush1.msra.mxu0 %v617
  %635 = vmatprep.subr.mxu0 0.0
  %636 = vmatpush1.msra.mxu0 %v625
  %637 = vmatprep.subr.mxu0 0.0
  %638 = vmatpush1.msra.mxu0 0.0
  %639 = vmatprep.subr.mxu0 0.0
  %640 = vmatpush1.msra.mxu0 0.0
  %641 = vmatprep.subr.mxu0 0.0
  %642 = vmatpush1.msra.mxu0 0.0
  %643 = vmatprep.subr.mxu0 0.0
  %644 = vmatpush1.msra.mxu0 0.0
  %645 = vmatprep.subr.mxu0 0.0
  %646 = vmatpush1.msra.mxu0 0.0
  %647 = vmatprep.subr.mxu0 0.0
  %648 = vmatpush1.msra.mxu0 0.0
  %649 = vmatprep.subr.mxu0 0.0
  %650 = vmatpush1.msra.mxu0 0.0
  %651 = vmatprep.subr.mxu0 0.0
  %652 = vmatpush1.msra.mxu0 0.0
  %653 = vmatprep.subr.mxu0 0.0
  %654 = vmatpush1.msra.mxu0 0.0
  %655 = vmatprep.subr.mxu0 0.0
  %656 = vmatpush1.msra.mxu0 0.0
  %657 = vmatprep.subr.mxu0 0.0
  %658 = vmatpush1.msra.mxu0 0.0
  %659 = vmatprep.subr.mxu0 0.0
  %660 = vmatpush1.msra.mxu0 0.0
  %661 = vmatprep.subr.mxu0 0.0
  %662 = vmatpush1.msra.mxu0 0.0
  %663 = vmatprep.subr.mxu0 0.0
  %664 = vmatpush1.msra.mxu0 0.0
  %665 = vmatprep.subr.mxu0 0.0
  %666 = vmatpush1.msra.mxu0 0.0
  %667 = vmatprep.subr.mxu0 0.0
  %668 = vmatpush1.msra.mxu0 0.0
  %669 = vmatprep.subr.mxu0 0.0
  %670 = vmatpush1.msra.mxu0 0.0
  %671 = vmatprep.subr.mxu0 0.0
  %672 = vmatpush1.msra.mxu0 0.0
  %673 = vmatprep.subr.mxu0 0.0
  %674 = vmatpush1.msra.mxu0 0.0
  %675 = vmatprep.subr.mxu0 0.0
  %676 = vmatpush1.msra.mxu0 0.0
  %677 = vmatprep.subr.mxu0 0.0
  %678 = vmatpush1.msra.mxu0 0.0
  %679 = vmatprep.subr.mxu0 0.0
  %680 = vmatpush1.msra.mxu0 0.0
  %681 = vmatprep.subr.mxu0 0.0
  %682 = vmatpush1.msra.mxu0 0.0
  %683 = vmatprep.subr.mxu0 0.0
  %684 = vmatpush1.msra.mxu0 0.0
  %685 = vmatprep.subr.mxu0 0.0
  %686 = vmatpush1.msra.mxu0 0.0
  %687 = vmatprep.subr.mxu0 0.0
  %688 = vmatpush1.msra.mxu0 0.0
  %689 = vmatprep.subr.mxu0 0.0
  %690 = vmatpush1.msra.mxu0 0.0
  %691 = vmatprep.mubr.f32.mxu0 0.0
  %692 = vmatmul.mubr.f32.gmra.mrb[0].mxu0 %v622
  %v693 = vpop.f32.mrb[0].mxu0
  %v694 = vadd.f32 0.0, %v693
  %v695 = vpop.f32.mrb[0].mxu0
  %696 = vdwg.mxu0
  %v697 = vmul.f32 %v694, 0.5
  %699 = vrot.lane.b32.xlu0 %v694, 110
  %v700 = vpop.permute.xlu0 %699
  %v702 = vmul.f32 %v694, %v700
  %704 = vrot.lane.b32.xlu0 %v702, 92
  %v705 = vpop.permute.xlu0 %704
  %v707 = vadd.f32 %v702, %v705
  %709 = vrot.lane.b32.xlu0 %v707, 110
  %v710 = vpop.permute.xlu0 %709
  %v712 = vsub.f32 %v697, %v710
  %vm713 = vcmask 140288
  %v714 = vsel %vm713, %v712, 0.0
  %715 = vadd.xlane.f32.xlu0 %v714
  %v716 = vpop.xlane.xlu0 %715
  %v717 = vlaneseq
  %v718 = vand.u32 %v717, 127
  %v719 = vsel %vm713, %v712, inf
  %720 = vmin.xlane.f32.xlu0 %v719
  %v721 = vpop.xlane.xlu0 %720
  %vm722 = vcmp.eq.f32.partialorder %v712, %v721
  %v723 = vsel %vm722, %v718, 18
  %v724 = vsel %vm713, %v723, 2147483647
  %v725 = vand.u32 %v724, 65535
  %v726 = vshra.s32 %v724, 16
  %v727 = vcvt.s32.f32 %v725
  %v728 = vcvt.s32.f32 %v726
  %729 = vmin.xlane.f32.xlu0 %v728
  %v730 = vpop.xlane.xlu0 %729
  %vm731 = vcmp.eq.f32.partialorder %v728, %v730
  %v732 = vsel %vm731, %v727, inf
  %733 = vmin.xlane.f32.xlu0 %v732
  %v734 = vpop.xlane.xlu0 %733
  %v735 = vcvt.f32.s32 %v734
  %v736 = vcvt.f32.s32 %v730
  %v737 = vshll.u32 %v736, 16
  %v738 = vadd.s32 %v737, %v735
  %v739 = vadd.f32 %v721, 0.0
  %vm740 = vcmp.eq.s32.totalorder %v718, %v738
  %v741 = vsel %vm740, inf, %v712
  %v742 = vsel %vm713, %v741, inf
  %743 = vmin.xlane.f32.xlu0 %v742
  %v744 = vpop.xlane.xlu0 %743
  %vm745 = vcmp.eq.f32.partialorder %v741, %v744
  %v746 = vsel %vm745, %v718, 18
  %v747 = vsel %vm713, %v746, 2147483647
  %v748 = vand.u32 %v747, 65535
  %v749 = vshra.s32 %v747, 16
  %v750 = vcvt.s32.f32 %v748
  %v751 = vcvt.s32.f32 %v749
  %752 = vmin.xlane.f32.xlu0 %v751
  %v753 = vpop.xlane.xlu0 %752
  %vm754 = vcmp.eq.f32.partialorder %v751, %v753
  %v755 = vsel %vm754, %v750, inf
  %756 = vmin.xlane.f32.xlu0 %v755
  %v757 = vpop.xlane.xlu0 %756
  %v758 = vcvt.f32.s32 %v757
  %v759 = vcvt.f32.s32 %v753
  %v760 = vshll.u32 %v759, 16
  %v761 = vadd.s32 %v760, %v758
  %v762 = vadd.f32 %v739, %v744
  %vm763 = vcmp.eq.s32.totalorder %v718, %v761
  %v764 = vsel %vm763, inf, %v741
  %v765 = vsel %vm713, %v764, inf
  %766 = vmin.xlane.f32.xlu0 %v765
  %v767 = vpop.xlane.xlu0 %766
  %v768 = vadd.f32 %v762, %v767
  %v769 = vsub.f32 %v716, %v768
  %v770 = vmul.f32 %v769, 0.06666667
  %vm771 = vcmask 1024
  %772 = vst.msk [vmem:[%s5] sm:$0x3] %vm771, %v770
  // Predicated region
  $region22: #{edge_ohkm_mse_loss.1} parent=0 // pred_check
    _
  $region23: #{edge_ohkm_mse_loss.1} parent=0 // pred_check_branch
    %774 = sbr.rel (0) target = $region25
  $region24: #{edge_ohkm_mse_loss.1} parent=0 // pred_region
    _
  $region25: #{edge_ohkm_mse_loss.1} parent=0 // pred_fallthru
    _
  // Predicated region
  $region26: #{edge_ohkm_mse_loss.1} parent=0 // pred_check
    _
  $region27: #{edge_ohkm_mse_loss.1} parent=0 // pred_check_branch
    %776 = sbr.rel (0) target = $region29
  $region28: #{edge_ohkm_mse_loss.1} parent=0 // pred_region
    _
  $region29: #{edge_ohkm_mse_loss.1} parent=0 // pred_fallthru
    _

</llo_original>
